<compile_context>
chip_gen: v5e
topology: v5e:2x2
jax: 0.10.0
libtpu: 0.0.40
codegen_flags: <defaults>
</compile_context>

<pallas_src>
import math

import jax
import jax.numpy as jnp
from jax.experimental import pallas as pl
from jax.experimental.pallas import tpu as pltpu

LANE = 128
_TILE_B_CAP = 2048


def _round_up(x, m):
    return (x + m - 1) // m * m


def _vmem_capacity_bytes():
    """Best-effort query of per-core VMEM capacity; falls back to v7x's 64 MiB."""
    try:
        info = pltpu.get_tpu_info()
        return int(getattr(info, "vmem_capacity_bytes", 64 << 20))
    except Exception:  # capability query only — never masks kernel build errors
        return 64 << 20


def _linear_kernel(x_ref, wt_ref, b_ref, o_ref):
    # Cast activations to the matmul dtype in-VMEM; MXU matmul, f32 accumulate.
    x = x_ref[...].astype(wt_ref.dtype)
    acc = jnp.dot(x, wt_ref[...], preferred_element_type=jnp.float32)
    o_ref[...] = (acc + b_ref[...]).astype(o_ref.dtype)


def init_params(key, dim, n_vals, mul=1.0):
    """Matches xavier_init: xavier_normal_ for the weight, zeros for the bias."""
    std = mul * math.sqrt(2.0 / (dim + n_vals))
    w = std * jax.random.normal(key, (n_vals, dim), dtype=jnp.float32)
    b = jnp.zeros((n_vals,), dtype=jnp.float32)
    return w, b


def prepare_params(weight, bias, *, matmul_dtype=jnp.bfloat16):
    """One-time layout prep: transpose the (n_vals, dim) torch-style weight to
    (dim, n_vals) and cast to the matmul dtype.  `matmul_dtype` is an explicit
    opt-in knob: use jnp.float32 for strict parity with the f32 nn.Linear."""
    n_vals, dim = weight.shape
    wt = weight.T.astype(matmul_dtype)                    # (dim, n_vals)
    b = bias.reshape(1, n_vals).astype(jnp.float32)       # (1, n_vals)
    return wt, b


def predict_category_set(x, wt, b, *, tile_b=None, tile_n=None, interpret=False):
    """Forward of PredictCategorySet: raw linear scores, shape (..., n_vals)."""
    *lead, dim = x.shape
    assert wt.shape[0] == dim, "weight/input dim mismatch"
    n_vals = wt.shape[1]

    x2 = x.reshape(-1, dim)
    B = x2.shape[0]
    x_itemsize = jnp.dtype(x.dtype).itemsize
    w_itemsize = jnp.dtype(wt.dtype).itemsize
    out_itemsize = x_itemsize  # output dtype == x.dtype

    # ---- N tiling: keep the true n_vals as a single lane block when small
    # (full-array-dim exemption => no padding, only useful output bytes are
    # written); tile at 128 lanes only when n_vals is genuinely large.
    if tile_n is None:
        tile_n = n_vals if n_vals <= 512 else LANE
    tile_n = min(tile_n, n_vals)
    assert tile_n == n_vals or tile_n % LANE == 0, \
        "tile_n must equal n_vals or be a multiple of 128"
    grid_n = pl.cdiv(n_vals, tile_n)

    # ---- per-generation VMEM budget ---------------------------------------
    vmem_cap = _vmem_capacity_bytes()
    if vmem_cap >= (100 << 20):          # 128-MiB VMEM parts (v5e / v6e)
        tile_budget, limit_cap = 64 << 20, 96 << 20
    else:                                # 64-MiB parts (v7x)
        tile_budget, limit_cap = 24 << 20, 40 << 20

    # Sublane packing: 8 rows/group for f32, 16 for bf16, 32 for int8/fp8.
    sub_mult = max(8, 32 // x_itemsize)

    # VMEM accounting: double-buffered x/out tiles + double-buffered weight/bias.
    per_row = 2 * dim * x_itemsize + 2 * tile_n * out_itemsize
    fixed = 2 * dim * tile_n * w_itemsize + 2 * tile_n * 4

    if tile_b is None:
        budget_rows = max(sub_mult, (tile_budget - fixed) // per_row)
        tile_b = min(_TILE_B_CAP, _round_up(B, sub_mult), budget_rows)
    tile_b = max(sub_mult, (tile_b // sub_mult) * sub_mult)
    grid_b = pl.cdiv(B, tile_b)

    # ---- size-adaptive grid ordering: put the axis whose operand would be
    # re-streamed the most OUTER, so the other (bigger) operand is fetched once.
    extra_w = (grid_b - 1) * dim * n_vals * w_itemsize   # extra bytes if batch is outer
    extra_x = (grid_n - 1) * B * dim * x_itemsize        # extra bytes if n is outer
    batch_outer = extra_w <= extra_x

    if batch_outer:
        grid = (grid_b, grid_n)
        x_map = lambda i, j: (i, 0)
        w_map = lambda i, j: (0, j)
        b_map = lambda i, j: (0, j)
        o_map = lambda i, j: (i, j)
    else:
        grid = (grid_n, grid_b)
        x_map = lambda j, i: (i, 0)
        w_map = lambda j, i: (0, j)
        b_map = lambda j, i: (0, j)
        o_map = lambda j, i: (i, j)

    vmem_limit = int(min(max(2 * (fixed + tile_b * per_row), 16 << 20), limit_cap))

    # Bytes actually moved given the chosen ordering (re-streamed operand included).
    x_bytes = B * dim * x_itemsize * (1 if batch_outer else grid_n)
    w_bytes = dim * n_vals * w_itemsize * (grid_b if batch_outer else 1)
    cost = pl.CostEstimate(
        flops=2 * B * dim * n_vals,
        transcendentals=0,
        bytes_accessed=int(x_bytes + w_bytes + n_vals * 4 + B * n_vals * out_itemsize),
    )

    grid_spec = pltpu.PrefetchScalarGridSpec(
        num_scalar_prefetch=0,
        grid=grid,
        in_specs=[
            pl.BlockSpec((tile_b, dim), x_map),
            pl.BlockSpec((dim, tile_n), w_map),
            pl.BlockSpec((1, tile_n), b_map),
        ],
        out_specs=pl.BlockSpec((tile_b, tile_n), o_map),
    )

    out = pl.pallas_call(
        _linear_kernel,
        out_shape=jax.ShapeDtypeStruct((B, n_vals), x.dtype),
        grid_spec=grid_spec,
        compiler_params=pltpu.CompilerParams(
            dimension_semantics=("parallel", "parallel"),
            vmem_limit_bytes=vmem_limit,
        ),
        cost_estimate=cost,
        interpret=interpret,
    )(x2, wt, b)

    return out.reshape(*lead, n_vals)


if __name__ == "__main__":
    # Small shapes consistent with the module: (batch, seq) token vectors of
    # hidden dim 32, scoring 16 category values.
    dim, n_vals = 32, 16
    lead = (2, 4)  # 8 rows total

    key = jax.random.PRNGKey(0)
    kx, kw, kb, kx2 = jax.random.split(key, 4)
    x = jax.random.normal(kx, (*lead, dim), dtype=jnp.float32)
    weight, bias = init_params(kw, dim, n_vals, mul=1.0)
    # Nonzero bias so the bias-add path is exercised (initialize() would zero it).
    bias = 0.05 * jax.random.normal(kb, (n_vals,), dtype=jnp.float32)

    # Default matmul_dtype=bf16 (explicit opt-in knob; use jnp.float32 for strict parity).
    wt, b = prepare_params(weight, bias)

    out = predict_category_set(x, wt, b)
    out = jax.block_until_ready(out)

    # Reference with the same bf16-rounded operands (kernel accumulates in f32).
    def ref_fn(xv):
        xr = xv.astype(jnp.bfloat16).astype(jnp.float32)
        wr = weight.astype(jnp.bfloat16).astype(jnp.float32)
        return jnp.einsum("...d,nd->...n", xr, wr) + bias

    assert out.shape == (*lead, n_vals)
    err = float(jnp.max(jnp.abs(out - ref_fn(x))))
    assert jnp.allclose(out, ref_fn(x), atol=1e-2, rtol=1e-2), err

    # Ragged batch (B=20 rows, not a multiple of the batch tile): exercises the
    # cdiv grid / partial-block path (no host-side padding of x).
    x_r = jax.random.normal(kx2, (4, 5, dim), dtype=jnp.float32)
    out_r = jax.block_until_ready(predict_category_set(x_r, wt, b))
    assert out_r.shape == (4, 5, n_vals)
    assert jnp.allclose(out_r, ref_fn(x_r), atol=1e-2, rtol=1e-2)

    print("KERNEL_OK")
</pallas_src>

<mosaic_0001>
module attributes {stable_mosaic.version = 11 : i64} {
  func.func @_linear_kernel(%arg0: i32, %arg1: i32, %arg2: memref<8x32xf32, #tpu.memory_space<vmem>>, %arg3: memref<32x16xbf16, #tpu.memory_space<vmem>>, %arg4: memref<1x16xf32, #tpu.memory_space<vmem>>, %arg5: memref<8x16xf32, #tpu.memory_space<vmem>>) attributes {dimension_semantics = [#tpu.dimension_semantics<parallel>, #tpu.dimension_semantics<parallel>], iteration_bounds = array<i64: 1, 1>, scalar_prefetch = 0 : i64, scratch_operands = 0 : i64, tpu.core_type = #tpu.core_type<tc>, window_params = [{transform_indices = @transform_0, window_bounds = array<i64: 8, 32>}, {transform_indices = @transform_1, window_bounds = array<i64: 32, 16>}, {transform_indices = @transform_2, window_bounds = array<i64: 1, 16>}, {transform_indices = @transform_3, window_bounds = array<i64: 8, 16>}]} {
    %c0 = arith.constant 0 : index
    %c0_0 = arith.constant 0 : index
    %0 = vector.load %arg2[%c0, %c0_0] : memref<8x32xf32, #tpu.memory_space<vmem>>, vector<8x32xf32>
    %1 = arith.truncf %0 : vector<8x32xf32> to vector<8x32xbf16>
    %c0_1 = arith.constant 0 : index
    %c0_2 = arith.constant 0 : index
    %2 = vector.load %arg3[%c0_1, %c0_2] : memref<32x16xbf16, #tpu.memory_space<vmem>>, vector<32x16xbf16>
    %cst = arith.constant dense<0.000000e+00> : vector<8x16xf32>
    %3 = tpu.matmul %1, %2, %cst {dimension_numbers = #tpu.dot_dimension_numbers<[1], [0], [0], [1], [0, 0, 1, 1], [], []>} : vector<8x32xbf16>, vector<32x16xbf16>, vector<8x16xf32> -> vector<8x16xf32>
    %c0_3 = arith.constant 0 : index
    %c0_4 = arith.constant 0 : index
    %4 = vector.load %arg4[%c0_3, %c0_4] : memref<1x16xf32, #tpu.memory_space<vmem>>, vector<1x16xf32>
    %5 = vector.broadcast %4 : vector<1x16xf32> to vector<8x16xf32>
    %6 = arith.addf %3, %5 : vector<8x16xf32>
    %c0_5 = arith.constant 0 : index
    %c0_6 = arith.constant 0 : index
    %7 = vector.load %arg5[%c0_5, %c0_6] : memref<8x16xf32, #tpu.memory_space<vmem>>, vector<8x16xf32>
    tpu.vector_store %arg5[%c0_5, %c0_6], %6 {strides = array<i32>} : memref<8x16xf32, #tpu.memory_space<vmem>>, vector<8x16xf32>,
    return
  }
  func.func @transform_0(%arg0: i32, %arg1: i32) -> (i32, i32) {
    %c0_i32 = arith.constant 0 : i32
    %c0_i32_0 = arith.constant 0 : i32
    return %arg0, %c0_i32 : i32, i32
  }
  func.func @transform_1(%arg0: i32, %arg1: i32) -> (i32, i32) {
    %c0_i32 = arith.constant 0 : i32
    %c0_i32_0 = arith.constant 0 : i32
    return %c0_i32, %arg1 : i32, i32
  }
  func.func @transform_2(%arg0: i32, %arg1: i32) -> (i32, i32) {
    %c0_i32 = arith.constant 0 : i32
    %c0_i32_0 = arith.constant 0 : i32
    return %c0_i32, %arg1 : i32, i32
  }
  func.func @transform_3(%arg0: i32, %arg1: i32) -> (i32, i32) {
    %c0_i32 = arith.constant 0 : i32
    return %arg0, %arg1 : i32, i32
  }
}

</mosaic_0001>

<llo_original>
// kernel: tpu_custom_call.1
$region0: #{tpu_custom_call.1}
  #allocation0 [shape = 'u32[]', space=smem, size = 0x4, offset = 0x4, fixed_abs, tag = 'smem constant byte address 0x4 - core index']
  #allocation1 [shape = 'u32[72,128]{1,0:T(1,128)}', space=vmem, size = 0x9000, scoped, tag = 'internal scratch']
  %s0 = inlined_call_operand.vmem [shape: f32[8,32], index: 0, kind: input, shape index: {}]
  %s1 = inlined_call_operand.vmem [shape: bf16[32,16], index: 1, kind: input, shape index: {}]
  %s2 = inlined_call_operand.vmem [shape: f32[1,16], index: 2, kind: input, shape index: {}]
  %s3 = inlined_call_operand.hbm [shape: f32[8,16], index: 3, kind: output, shape index: {}]
  %s4 = sld [smem:[#allocation0]]
  $region22: #{tpu_custom_call.1} parent=0
    _
  %s6 = ssub.s32 1, %s4
  %s7 = scalar_select 0, %s6, %s4
  $region1: #{tpu_custom_call.1} parent=0
    #allocation2 [shape = 'u8[4096]{0}', space=vmem, size = 0x1000, scoped, tag = 'output window, operand 0, single buffered']
    #allocation3 [shape = 's32[1]{0}', space=sflag, size = 0x4, scoped, tag = 'scoped memory for tpu_custom_call.1']
    %8 = vsyncpa [#allocation3], 0
    // Predicated region
    $region2: #{tpu_custom_call.1} parent=1 // pred_check
      _
    $region3: #{tpu_custom_call.1} parent=1 // pred_check_branch
      %10 = sbr.rel (0) target = $region5
    $region4: #{tpu_custom_call.1} parent=1 // pred_region
      _
    $region5: #{tpu_custom_call.1} parent=1 // pred_fallthru
      _
    // Predicated region
    $region6: #{tpu_custom_call.1} parent=1 // pred_check
      _
    $region7: #{tpu_custom_call.1} parent=1 // pred_check_branch
      %12 = sbr.rel (0) target = $region9
    $region8: #{tpu_custom_call.1} parent=1 // pred_region
      _
    $region9: #{tpu_custom_call.1} parent=1 // pred_fallthru
      _
    // Predicated region
    $region10: #{tpu_custom_call.1} parent=1 // pred_check
      _
    $region11: #{tpu_custom_call.1} parent=1 // pred_check_branch
      %14 = sbr.rel (0) target = $region13
    $region12: #{tpu_custom_call.1} parent=1 // pred_region
      _
    $region13: #{tpu_custom_call.1} parent=1 // pred_fallthru
      _
    %v16 = vld [vmem:[%s0] sm:$0xff]
    %v17 = vpack.c.bf16 %v16, %v16
    %v18 = vld [vmem:[%s1] sm:$0xf]
    %v19 = vld [vmem:[%s1 + $0x4] sm:$0xf]
    %v20 = vld [vmem:[%s1 + $0x8] sm:$0xf]
    %v21 = vld [vmem:[%s1 + $0xc] sm:$0xf]
    %v22 = vld [vmem:[%s2] sm:$0x1]
    %v24 = vperm.slane %v22, 0
    %v30 = vunpack.c.l.b16 %v18
    %v31 = vunpack.c.l.b16 %v19
    %v32 = vunpack.c.l.b16 %v20
    %v33 = vunpack.c.l.b16 %v21
    %v34 = vpack.c.b16 %v31, %v30
    %v35 = vpack.c.b16 %v33, %v32
    %vm38 = vcmask 261120
    %v40 = vsel %vm38, %v17, 0
    %42 = vmatpush.bf16.msra.mxu0 0
    %43 = vmatpush.bf16.msra.mxu0 0
    %44 = vmatpush.bf16.msra.mxu0 0
    %45 = vmatpush.bf16.msra.mxu0 0
    %46 = vmatpush.bf16.msra.mxu0 0
    %47 = vmatpush.bf16.msra.mxu0 0
    %48 = vmatpush.bf16.msra.mxu0 %v35
    %49 = vmatpush.bf16.msra.mxu0 %v34
    %50 = vmatmul.bf16.gmra.mxu0 %v40
    %v51 = vpop.f32.mrf.mxu0
    %v52 = vadd.f32 %v24, %v51
    %v53 = vpop.f32.mrf.mxu0
    %54 = vdwg.mxu0
    %vm55 = vcmask 130048
    %56 = vst.msk [vmem:[#allocation2] sm:$0xff] %vm55, %v52
    // Predicated region
    $region14: #{tpu_custom_call.1} parent=1 // pred_check
      _
    $region15: #{tpu_custom_call.1} parent=1 // pred_check_branch
      %58 = sbr.rel (0) target = $region17
    $region16: #{tpu_custom_call.1} parent=1 // pred_region
      %60 = vsyncadd [#allocation3], 0
      %s62 = sshll.u32 [#allocation2], 4
      %s63 = int_to_ptr.vmem [resolvable:$true] %s62
      %s64 = sshll.u32 %s3, 4
      %s65 = int_to_ptr.hbm [resolvable:$true] %s64
      %67 = dma.vmem_to_hbm [thread:$0]  %s63, 128, %s65, [#allocation3]
    $region17: #{tpu_custom_call.1} parent=1 // pred_fallthru
      _
    // Predicated region
    $region18: #{tpu_custom_call.1} parent=1 // pred_check
      _
    $region19: #{tpu_custom_call.1} parent=1 // pred_check_branch
      %69 = sbr.rel (0) target = $region21
    $region20: #{tpu_custom_call.1} parent=1 // pred_region
      %71 = dma.done [#allocation3], 128
    $region21: #{tpu_custom_call.1} parent=1 // pred_fallthru
      _
    %72 = vsyncpa [#allocation3], 1

</llo_original>
